<compile_context>
chip_gen: v7x
topology: tpu7x:2x2x1
jax: 0.10.0
libtpu: 0.0.40
codegen_flags: <defaults>
</compile_context>

<pallas_src>
import functools

import jax
import jax.numpy as jnp
from jax.experimental import pallas as pl
from jax.experimental.pallas import tpu as pltpu


# -----------------------------------------------------------------------------
# VMEM budgeting helpers (per-chip: v5e/v6e 128 MiB, v7x 64 MiB per TensorCore)
# -----------------------------------------------------------------------------
def _vmem_capacity_bytes():
    try:
        info = pltpu.get_tpu_info()
        cap = int(getattr(info, "vmem_capacity_bytes", 0))
        if cap > 0:
            return cap
    except Exception:
        pass
    return 64 << 20  # conservative default (v7x per-TC VMEM)


def _vmem_limit_for(need_bytes, cap):
    # Always lift v5e's 16 MiB scoped default; never request more than ~85% of
    # physical per-core VMEM (important on v7x's 64 MiB per TC).
    return int(max(32 << 20, min(int(need_bytes * 1.5) + (8 << 20), int(cap * 0.85))))


# -----------------------------------------------------------------------------
# Kernel A: fused linear  out_i = (x @ W_cat + b_cat)[:, split_i]
#   W_cat already (in, out)-layout, pre-cast; ONE wide MXU dot per tile.
# -----------------------------------------------------------------------------
def _fused_linear_kernel(splits, compute_dtype, x_ref, w_ref, b_ref, *out_refs):
    x = x_ref[...]
    if compute_dtype is not None and x.dtype != compute_dtype:
        x = x.astype(compute_dtype)          # per-tile activation cast only
    acc = jnp.dot(x, w_ref[...], preferred_element_type=jnp.float32)
    acc = acc + b_ref[...]                   # f32 bias, broadcast over rows
    if len(out_refs) == 1:
        out_refs[0][...] = acc.astype(out_refs[0].dtype)
    else:
        start = 0
        for o_ref, n in zip(out_refs, splits):
            o_ref[...] = acc[:, start:start + n].astype(o_ref.dtype)
            start += n


def fused_linear_split(x2d, w_cat, b_cat, splits, *, compute_dtype=None,
                       out_dtype=None):
    """x2d: (M, K); w_cat: (K, sum(splits)); b_cat: (1, sum(splits)) f32.

    Returns a tuple of (M, split_i) arrays (separate outputs so the caller's
    head-view reshapes remain pure metadata, no slice copies).
    """
    M, K = x2d.shape
    Ntot = int(w_cat.shape[1])
    splits = tuple(int(n) for n in splits)
    assert sum(splits) == Ntot and b_cat.shape == (1, Ntot)
    if out_dtype is None:
        out_dtype = x2d.dtype

    xb = jnp.dtype(x2d.dtype).itemsize
    wb = jnp.dtype(w_cat.dtype).itemsize
    ob = jnp.dtype(out_dtype).itemsize

    cap = _vmem_capacity_bytes()
    budget = int(cap * 0.55)
    resident = K * Ntot * wb + Ntot * 4          # constant-index weight + bias
    m8 = ((M + 7) // 8) * 8
    tm = None
    for cand in (1024, 512, 256, 128, 64, 32, 16, 8):
        if cand > m8:
            continue
        need = resident + 2 * cand * (K * xb + Ntot * ob) + cand * Ntot * 4
        if need <= budget:
            tm = cand
            break
    if tm is None:
        # TODO(synk): for very large d_model (f32 weights alone exceed the VMEM
        # budget) add an output-column grid axis so W_cat is tiled, not resident.
        tm = 128
    need = resident + 2 * tm * (K * xb + Ntot * ob) + tm * Ntot * 4
    vmem_limit = _vmem_limit_for(need, cap)

    grid = (pl.cdiv(M, tm),)                     # cdiv grid: no host padding
    outs = pl.pallas_call(
        functools.partial(_fused_linear_kernel, splits, compute_dtype),
        out_shape=[jax.ShapeDtypeStruct((M, n), out_dtype) for n in splits],
        grid=grid,
        in_specs=[
            pl.BlockSpec((tm, K), lambda i: (i, 0)),      # activation tile
            pl.BlockSpec((K, Ntot), lambda i: (0, 0)),    # resident fused weight
            pl.BlockSpec((1, Ntot), lambda i: (0, 0)),    # resident fused bias
        ],
        out_specs=[pl.BlockSpec((tm, n), lambda i: (i, 0)) for n in splits],
        compiler_params=pltpu.CompilerParams(
            dimension_semantics=("parallel",),
            vmem_limit_bytes=vmem_limit),
    )(x2d, w_cat, b_cat)
    return tuple(outs)


# -----------------------------------------------------------------------------
# Kernel B: fused E/F sequence down-projection, one grid step per batch.
#   out[b][kk, h*dh + d] = sum_s W[kk, s] * in[b, h, s, d] + bias[kk]
# The H raw-view head slabs are packed side by side along lanes in a VMEM
# scratch (seq, H*dh) so each projection is ONE full-width MXU matmul and ONE
# lane-dense (kdim, D) store.
# -----------------------------------------------------------------------------
def _downproj_kernel(H, dh, kin_ref, vin_ref, ew_ref, eb_ref, fw_ref, fb_ref,
                     ko_ref, vo_ref, xs_ref):
    def proj(in_ref, w_ref, b_ref, o_ref):
        for h in range(H):                                   # unrolled, H small
            xs_ref[:, h * dh:(h + 1) * dh] = in_ref[h].astype(xs_ref.dtype)
        acc = jnp.dot(w_ref[...], xs_ref[...], preferred_element_type=jnp.float32)
        o_ref[...] = (acc + b_ref[...]).astype(o_ref.dtype)

    proj(kin_ref, ew_ref, eb_ref, ko_ref)
    proj(vin_ref, fw_ref, fb_ref, vo_ref)


def downproject_kv(k4, v4, E_w, E_b2, F_w, F_b2, *, compute_dtype=None,
                   out_dtype=None):
    """k4, v4: (B, H, seq, dh) raw-view slabs -> (B, kdim, H*dh) head-major."""
    B, H, seq, dh = k4.shape
    D = H * dh
    kdim = int(E_w.shape[0])
    if out_dtype is None:
        out_dtype = k4.dtype
    scratch_dtype = compute_dtype if compute_dtype is not None else k4.dtype

    xb = jnp.dtype(k4.dtype).itemsize
    wb = jnp.dtype(E_w.dtype).itemsize
    ob = jnp.dtype(out_dtype).itemsize
    sb = jnp.dtype(scratch_dtype).itemsize
    cap = _vmem_capacity_bytes()
    need = (2 * kdim * seq * wb + 2 * kdim * 4    # resident E/F weights + biases
            + 2 * 2 * seq * D * xb                # double-buffered K,V inputs
            + 2 * 2 * kdim * D * ob               # double-buffered outputs
            + seq * D * sb + 2 * kdim * D * 4)    # packing scratch + f32 acc
    vmem_limit = _vmem_limit_for(need, cap)
    # TODO(synk): for very long Linformer sequences (seq*D*~3 elems approaching
    # per-core VMEM) add a seq ("arbitrary") grid axis with a pl.when-initialized
    # f32 accumulator instead of keeping the whole (seq, D) slab resident.

    ko, vo = pl.pallas_call(
        functools.partial(_downproj_kernel, H, dh),
        out_shape=[jax.ShapeDtypeStruct((B, kdim, D), out_dtype),
                   jax.ShapeDtypeStruct((B, kdim, D), out_dtype)],
        grid=(B,),
        in_specs=[
            pl.BlockSpec((None, H, seq, dh), lambda b: (b, 0, 0, 0)),
            pl.BlockSpec((None, H, seq, dh), lambda b: (b, 0, 0, 0)),
            pl.BlockSpec((kdim, seq), lambda b: (0, 0)),
            pl.BlockSpec((kdim, 1), lambda b: (0, 0)),
            pl.BlockSpec((kdim, seq), lambda b: (0, 0)),
            pl.BlockSpec((kdim, 1), lambda b: (0, 0)),
        ],
        out_specs=[
            pl.BlockSpec((None, kdim, D), lambda b: (b, 0, 0)),
            pl.BlockSpec((None, kdim, D), lambda b: (b, 0, 0)),
        ],
        scratch_shapes=[pltpu.VMEM((seq, D), scratch_dtype)],
        compiler_params=pltpu.CompilerParams(
            dimension_semantics=("parallel",),
            vmem_limit_bytes=vmem_limit),
    )(k4, v4, E_w, E_b2, F_w, F_b2)
    return ko, vo


# -----------------------------------------------------------------------------
# Module
# -----------------------------------------------------------------------------
class MultiHeadAttentionPallas:
    """Mirrors linformer/attention/multi_head_attn.py::MultiHeadAttention.forward."""

    def __init__(self, seq_length, d_model, n_head, k, key, *, compute_dtype=None):
        assert d_model % n_head == 0
        self.seq_length = seq_length
        self.d_model = d_model
        self.n_head = n_head
        self.n_div_head = d_model // n_head
        self.k = k
        self.compute_dtype = compute_dtype   # e.g. jnp.bfloat16 for MXU-native compute

        ks = jax.random.split(key, 5)
        scale = 0.02
        # PyTorch nn.Linear layout (out, in) -- kept in f32 for the pure-JAX reference.
        self.Q_w = scale * jax.random.normal(ks[0], (d_model, d_model), jnp.float32)
        self.Q_b = jnp.zeros((d_model,), jnp.float32)
        self.K_w = scale * jax.random.normal(ks[1], (d_model, d_model), jnp.float32)
        self.K_b = jnp.zeros((d_model,), jnp.float32)
        self.V_w = scale * jax.random.normal(ks[2], (d_model, d_model), jnp.float32)
        self.V_b = jnp.zeros((d_model,), jnp.float32)
        self.E_w = scale * jax.random.normal(ks[3], (k, seq_length), jnp.float32)
        self.E_b = jnp.zeros((k,), jnp.float32)
        self.F_w = scale * jax.random.normal(ks[4], (k, seq_length), jnp.float32)
        self.F_b = jnp.zeros((k,), jnp.float32)

        wdt = compute_dtype if compute_dtype is not None else jnp.float32
        # Fused (in, out)-layout weight slabs, pre-transposed AND pre-cast ONCE.
        self.QKV_wt = jnp.concatenate(
            [self.Q_w.T, self.K_w.T, self.V_w.T], axis=1).astype(wdt)   # (D, 3D)
        self.QKV_b = jnp.concatenate(
            [self.Q_b, self.K_b, self.V_b]).reshape(1, -1)              # f32 (1, 3D)
        self.Q_wt = self.Q_w.T.astype(wdt)
        self.Q_b1 = self.Q_b.reshape(1, -1)
        self.KV_wt = jnp.concatenate([self.K_w.T, self.V_w.T], axis=1).astype(wdt)
        self.KV_b = jnp.concatenate([self.K_b, self.V_b]).reshape(1, -1)
        # E/F consumed as (k, seq) directly (W @ X) -- no transpose needed.
        self.E_wc = self.E_w.astype(wdt)
        self.E_bc = self.E_b.reshape(k, 1)      # f32 column bias
        self.F_wc = self.F_w.astype(wdt)
        self.F_bc = self.F_b.reshape(k, 1)

    def __call__(self, emb, enc_inputs=None):
        B, seq_len, D = emb.shape
        H, dh, kd = self.n_head, self.n_div_head, self.k
        cdt = self.compute_dtype
        out_dtype = cdt if cdt is not None else emb.dtype

        if enc_inputs is None:
            # Fused Q/K/V: activation read once, one wide dot per tile.
            q2d, k2d, v2d = fused_linear_split(
                emb.reshape(B * seq_len, D), self.QKV_wt, self.QKV_b,
                (D, D, D), compute_dtype=cdt, out_dtype=out_dtype)
            src_len = seq_len
        else:
            src_len = enc_inputs.shape[1]
            (q2d,) = fused_linear_split(
                emb.reshape(B * seq_len, D), self.Q_wt, self.Q_b1,
                (D,), compute_dtype=cdt, out_dtype=out_dtype)
            k2d, v2d = fused_linear_split(
                enc_inputs.reshape(B * src_len, D), self.KV_wt, self.KV_b,
                (D, D), compute_dtype=cdt, out_dtype=out_dtype)

        # Same memory reinterpretation as torch .view(B, H, seq, dh) on a
        # contiguous (B, seq, D) tensor (pure metadata reshape, no copy).
        q = q2d.reshape(B, H, seq_len, dh)

        assert src_len == self.seq_length, (
            "E/F projections require src seq_len == construction-time "
            "seq_length (same constraint as the PyTorch module).")
        k4 = k2d.reshape(B, H, src_len, dh)
        v4 = v2d.reshape(B, H, src_len, dh)

        ko, vo = downproject_kv(k4, v4, self.E_wc, self.E_bc,
                                self.F_wc, self.F_bc,
                                compute_dtype=cdt, out_dtype=out_dtype)
        # (B, kd, H*dh) head-major along lanes -> (B, H, kd, dh); kd << seq so
        # this wrapper transpose is tiny compared to the old per-(b,h) layout.
        k_out = ko.reshape(B, kd, H, dh).transpose(0, 2, 1, 3)
        v_out = vo.reshape(B, kd, H, dh).transpose(0, 2, 1, 3)
        return q, k_out, v_out


# -----------------------------------------------------------------------------
# Pure-JAX reference that follows the PyTorch code path literally
# (permute -> Linear(seq->k) -> permute back), for an independent check.
# -----------------------------------------------------------------------------
def _reference_forward(mha, emb, enc_inputs=None):
    def lin(x2d, w, b):
        return x2d @ w.T + b

    B, seq_len, D = emb.shape
    H, dh, kd = mha.n_head, mha.n_div_head, mha.k
    q = lin(emb.reshape(B * seq_len, D), mha.Q_w, mha.Q_b).reshape(B, H, seq_len, dh)
    src = emb if enc_inputs is None else enc_inputs
    s = src.shape[1]
    k_ = lin(src.reshape(B * s, D), mha.K_w, mha.K_b).reshape(B, H, s, dh)
    v_ = lin(src.reshape(B * s, D), mha.V_w, mha.V_b).reshape(B, H, s, dh)
    k_t = jnp.transpose(k_, (0, 1, 3, 2)).reshape(B * H * dh, s)
    k_out = jnp.transpose(lin(k_t, mha.E_w, mha.E_b).reshape(B, H, dh, kd), (0, 1, 3, 2))
    v_t = jnp.transpose(v_, (0, 1, 3, 2)).reshape(B * H * dh, s)
    v_out = jnp.transpose(lin(v_t, mha.F_w, mha.F_b).reshape(B, H, dh, kd), (0, 1, 3, 2))
    return q, k_out, v_out


if __name__ == "__main__":
    # Small, module-consistent shapes: batch=2, seq=8, d_model=32, n_head=4, k=4
    batch, seq_length, d_model, n_head, k_proj = 2, 8, 32, 4, 4
    dh = d_model // n_head

    key = jax.random.PRNGKey(0)
    k_emb, k_params, k_enc = jax.random.split(key, 3)
    emb = jax.random.normal(k_emb, (batch, seq_length, d_model), jnp.float32)

    # --- f32 path (tight tolerance) -----------------------------------------
    mha = MultiHeadAttentionPallas(seq_length, d_model, n_head, k_proj, k_params)
    q, k_out, v_out = mha(emb)
    jax.block_until_ready((q, k_out, v_out))

    q_r, k_r, v_r = _reference_forward(mha, emb)
    assert q.shape == (batch, n_head, seq_length, dh)
    assert k_out.shape == (batch, n_head, k_proj, dh)
    assert v_out.shape == (batch, n_head, k_proj, dh)
    assert jnp.allclose(q, q_r, atol=1e-5)
    assert jnp.allclose(k_out, k_r, atol=1e-5)
    assert jnp.allclose(v_out, v_r, atol=1e-5)

    # --- cross-attention (enc_inputs) path ----------------------------------
    enc = jax.random.normal(k_enc, (batch, seq_length, d_model), jnp.float32)
    q2, k2, v2 = mha(emb, enc)
    jax.block_until_ready((q2, k2, v2))
    q2_r, k2_r, v2_r = _reference_forward(mha, emb, enc)
    assert jnp.allclose(q2, q2_r, atol=1e-5)
    assert jnp.allclose(k2, k2_r, atol=1e-5)
    assert jnp.allclose(v2, v2_r, atol=1e-5)

    # --- bf16 MXU-compute path (same params, loose tolerance) ---------------
    mha_bf16 = MultiHeadAttentionPallas(seq_length, d_model, n_head, k_proj,
                                        k_params, compute_dtype=jnp.bfloat16)
    qb, kb, vb = mha_bf16(emb)
    jax.block_until_ready((qb, kb, vb))
    assert jnp.allclose(qb.astype(jnp.float32), q_r, atol=1e-2, rtol=5e-2)
    assert jnp.allclose(kb.astype(jnp.float32), k_r, atol=1e-2, rtol=5e-2)
    assert jnp.allclose(vb.astype(jnp.float32), v_r, atol=1e-2, rtol=5e-2)

    print("KERNEL_OK")
</pallas_src>

<mosaic_0001>
module attributes {stable_mosaic.version = 11 : i64} {
  func.func @_fused_linear_kernel(%arg0: i32, %arg1: memref<16x32xf32, #tpu.memory_space<vmem>>, %arg2: memref<32x96xf32, #tpu.memory_space<vmem>>, %arg3: memref<1x96xf32, #tpu.memory_space<vmem>>, %arg4: memref<16x32xf32, #tpu.memory_space<vmem>>, %arg5: memref<16x32xf32, #tpu.memory_space<vmem>>, %arg6: memref<16x32xf32, #tpu.memory_space<vmem>>) attributes {dimension_semantics = [#tpu.dimension_semantics<parallel>], iteration_bounds = array<i64: 1>, scalar_prefetch = 0 : i64, scratch_operands = 0 : i64, tpu.core_type = #tpu.core_type<tc>, window_params = [{transform_indices = @transform_0, window_bounds = array<i64: 16, 32>}, {pipeline_mode = #tpu.pipeline_mode<synchronous>, transform_indices = @transform_1, window_bounds = array<i64: 32, 96>}, {pipeline_mode = #tpu.pipeline_mode<synchronous>, transform_indices = @transform_2, window_bounds = array<i64: 1, 96>}, {transform_indices = @transform_3, window_bounds = array<i64: 16, 32>}, {transform_indices = @transform_4, window_bounds = array<i64: 16, 32>}, {transform_indices = @transform_5, window_bounds = array<i64: 16, 32>}]} {
    %c0 = arith.constant 0 : index
    %c0_0 = arith.constant 0 : index
    %0 = vector.load %arg1[%c0, %c0_0] : memref<16x32xf32, #tpu.memory_space<vmem>>, vector<16x32xf32>
    %c0_1 = arith.constant 0 : index
    %c0_2 = arith.constant 0 : index
    %1 = vector.load %arg2[%c0_1, %c0_2] : memref<32x96xf32, #tpu.memory_space<vmem>>, vector<32x96xf32>
    %cst = arith.constant dense<0.000000e+00> : vector<16x96xf32>
    %2 = tpu.matmul %0, %1, %cst {dimension_numbers = #tpu.dot_dimension_numbers<[1], [0], [0], [1], [0, 0, 1, 1], [], []>} : vector<16x32xf32>, vector<32x96xf32>, vector<16x96xf32> -> vector<16x96xf32>
    %c0_3 = arith.constant 0 : index
    %c0_4 = arith.constant 0 : index
    %3 = vector.load %arg3[%c0_3, %c0_4] : memref<1x96xf32, #tpu.memory_space<vmem>>, vector<1x96xf32>
    %4 = vector.broadcast %3 : vector<1x96xf32> to vector<16x96xf32>
    %5 = arith.addf %2, %4 : vector<16x96xf32>
    %6 = vector.extract_strided_slice %5 {offsets = [0, 0], sizes = [16, 32], strides = [1, 1]} : vector<16x96xf32> to vector<16x32xf32>
    %c0_5 = arith.constant 0 : index
    %c0_6 = arith.constant 0 : index
    %7 = vector.load %arg4[%c0_5, %c0_6] : memref<16x32xf32, #tpu.memory_space<vmem>>, vector<16x32xf32>
    tpu.vector_store %arg4[%c0_5, %c0_6], %6 {strides = array<i32>} : memref<16x32xf32, #tpu.memory_space<vmem>>, vector<16x32xf32>,
    %8 = vector.extract_strided_slice %5 {offsets = [0, 32], sizes = [16, 32], strides = [1, 1]} : vector<16x96xf32> to vector<16x32xf32>
    %c0_7 = arith.constant 0 : index
    %c0_8 = arith.constant 0 : index
    %9 = vector.load %arg5[%c0_7, %c0_8] : memref<16x32xf32, #tpu.memory_space<vmem>>, vector<16x32xf32>
    tpu.vector_store %arg5[%c0_7, %c0_8], %8 {strides = array<i32>} : memref<16x32xf32, #tpu.memory_space<vmem>>, vector<16x32xf32>,
    %10 = vector.extract_strided_slice %5 {offsets = [0, 64], sizes = [16, 32], strides = [1, 1]} : vector<16x96xf32> to vector<16x32xf32>
    %c0_9 = arith.constant 0 : index
    %c0_10 = arith.constant 0 : index
    %11 = vector.load %arg6[%c0_9, %c0_10] : memref<16x32xf32, #tpu.memory_space<vmem>>, vector<16x32xf32>
    tpu.vector_store %arg6[%c0_9, %c0_10], %10 {strides = array<i32>} : memref<16x32xf32, #tpu.memory_space<vmem>>, vector<16x32xf32>,
    return
  }
  func.func @transform_0(%arg0: i32) -> (i32, i32) {
    %c0_i32 = arith.constant 0 : i32
    %c0_i32_0 = arith.constant 0 : i32
    return %arg0, %c0_i32 : i32, i32
  }
  func.func @transform_1(%arg0: i32) -> (i32, i32) {
    %c0_i32 = arith.constant 0 : i32
    %c0_i32_0 = arith.constant 0 : i32
    %c0_i32_1 = arith.constant 0 : i32
    return %c0_i32, %c0_i32_0 : i32, i32
  }
  func.func @transform_2(%arg0: i32) -> (i32, i32) {
    %c0_i32 = arith.constant 0 : i32
    %c0_i32_0 = arith.constant 0 : i32
    %c0_i32_1 = arith.constant 0 : i32
    return %c0_i32, %c0_i32_0 : i32, i32
  }
  func.func @transform_3(%arg0: i32) -> (i32, i32) {
    %c0_i32 = arith.constant 0 : i32
    %c0_i32_0 = arith.constant 0 : i32
    return %arg0, %c0_i32 : i32, i32
  }
  func.func @transform_4(%arg0: i32) -> (i32, i32) {
    %c0_i32 = arith.constant 0 : i32
    %c0_i32_0 = arith.constant 0 : i32
    return %arg0, %c0_i32 : i32, i32
  }
  func.func @transform_5(%arg0: i32) -> (i32, i32) {
    %c0_i32 = arith.constant 0 : i32
    %c0_i32_0 = arith.constant 0 : i32
    return %arg0, %c0_i32 : i32, i32
  }
}

</mosaic_0001>

<llo_original>
// kernel: tpu_custom_call.1
$region0: #{tpu_custom_call.1}
  #allocation0 [shape = 'u32[]', space=smem, size = 0x4, offset = 0x4, fixed_abs, tag = 'smem constant byte address 0x4 - core index']
  #allocation1 [shape = 'u32[144,128]{1,0:T(1,128)}', space=vmem, size = 0x12000, scoped, tag = 'internal scratch']
  %s0 = inlined_call_operand.hbm [shape: f32[16,32], index: 0, kind: input, shape index: {}]
  %s1 = inlined_call_operand.hbm [shape: f32[32,96], index: 1, kind: input, shape index: {}]
  %s2 = inlined_call_operand.vmem [shape: f32[1,96], index: 2, kind: input, shape index: {}]
  %s3 = inlined_call_operand.hbm [shape: f32[16,32], index: 3, kind: output, shape index: {0}]
  %s4 = inlined_call_operand.hbm [shape: f32[16,32], index: 4, kind: output, shape index: {1}]
  %s5 = inlined_call_operand.hbm [shape: f32[16,32], index: 5, kind: output, shape index: {2}]
  %6 = xla_tuple %s3, %s4, %s5
  %s7 = sld [smem:[#allocation0]]
  $region46: #{tpu_custom_call.1} parent=0
    _
  %s9 = ssub.s32 1, %s7
  %s10 = scalar_select 0, %s9, %s7
  $region1: #{tpu_custom_call.1} parent=0
    #allocation2 [shape = 'u8[8192]{0}', space=vmem, size = 0x2000, scoped, tag = 'input window, operand 0, single buffered']
    #allocation3 [shape = 's32[1]{0}', space=sflag, size = 0x4, scoped, tag = 'scoped memory for tpu_custom_call.1']
    #allocation4 [shape = 's32[1]{0}', space=sflag, size = 0x4, scoped, tag = 'scoped memory for tpu_custom_call.1']
    #allocation5 [shape = 'u8[16384]{0}', space=vmem, size = 0x4000, scoped, tag = 'input window, operand 1, single buffered']
    #allocation6 [shape = 's32[1]{0}', space=sflag, size = 0x4, scoped, tag = 'scoped memory for tpu_custom_call.1']
    #allocation7 [shape = 'u8[8192]{0}', space=vmem, size = 0x2000, scoped, tag = 'output window, operand 0, single buffered']
    #allocation8 [shape = 'u8[8192]{0}', space=vmem, size = 0x2000, scoped, tag = 'output window, operand 1, single buffered']
    #allocation9 [shape = 's32[1]{0}', space=sflag, size = 0x4, scoped, tag = 'scoped memory for tpu_custom_call.1']
    #allocation10 [shape = 'u8[8192]{0}', space=vmem, size = 0x2000, scoped, tag = 'output window, operand 2, single buffered']
    %11 = vsyncpa [#allocation3], 0
    %12 = vsyncpa [#allocation6], 0
    %13 = vsyncpa [#allocation4], 0
    %14 = vsyncpa [#allocation9], 0
    // Predicated region
    $region2: #{tpu_custom_call.1} parent=1 // pred_check
      _
    $region3: #{tpu_custom_call.1} parent=1 // pred_check_branch
      %16 = sbr.rel (0) target = $region5
    $region4: #{tpu_custom_call.1} parent=1 // pred_region
      %s18 = ssub.s32 256, 256
      %19 = vsyncadd [#allocation3], %s18
      %s20 = sshll.u32 [#allocation2], 4
      %s21 = int_to_ptr.vmem [resolvable:$true] %s20
      %26 = dma.hbm_to_vmem [thread:$0]  %s0, 256, %s21, [#allocation3], 128, 128, 8
    $region5: #{tpu_custom_call.1} parent=1 // pred_fallthru
      _
    // Predicated region
    $region6: #{tpu_custom_call.1} parent=1 // pred_check
      _
    $region7: #{tpu_custom_call.1} parent=1 // pred_check_branch
      %28 = sbr.rel (0) target = $region9
    $region8: #{tpu_custom_call.1} parent=1 // pred_region
      %s30 = ssub.s32 512, 512
      %31 = vsyncadd [#allocation6], %s30
      %s32 = sshll.u32 [#allocation5], 4
      %s33 = int_to_ptr.vmem [resolvable:$true] %s32
      %38 = dma.hbm_to_vmem [thread:$0]  %s1, 512, %s33, [#allocation6], 128, 128, 8
    $region9: #{tpu_custom_call.1} parent=1 // pred_fallthru
      _
    // Predicated region
    $region10: #{tpu_custom_call.1} parent=1 // pred_check
      _
    $region11: #{tpu_custom_call.1} parent=1 // pred_check_branch
      %40 = sbr.rel (0) target = $region13
    $region12: #{tpu_custom_call.1} parent=1 // pred_region
      _
    $region13: #{tpu_custom_call.1} parent=1 // pred_fallthru
      _
    // Predicated region
    $region14: #{tpu_custom_call.1} parent=1 // pred_check
      _
    $region15: #{tpu_custom_call.1} parent=1 // pred_check_branch
      %42 = sbr.rel (0) target = $region17
    $region16: #{tpu_custom_call.1} parent=1 // pred_region
      %43 = dma.done [#allocation3], 256
    $region17: #{tpu_custom_call.1} parent=1 // pred_fallthru
      _
    // Predicated region
    $region18: #{tpu_custom_call.1} parent=1 // pred_check
      _
    $region19: #{tpu_custom_call.1} parent=1 // pred_check_branch
      %45 = sbr.rel (0) target = $region21
    $region20: #{tpu_custom_call.1} parent=1 // pred_region
      %46 = dma.done [#allocation6], 512
    $region21: #{tpu_custom_call.1} parent=1 // pred_fallthru
      _
    %v47 = vld [vmem:[#allocation2] sm:$0xff]
    %v48 = vld [vmem:[#allocation2 + $0x8] sm:$0xff]
    %v49 = vld [vmem:[#allocation5] sm:$0xff]
    %v50 = vld [vmem:[#allocation5 + $0x8] sm:$0xff]
    %v51 = vld [vmem:[#allocation5 + $0x10] sm:$0xff]
    %v52 = vld [vmem:[#allocation5 + $0x18] sm:$0xff]
    %v53 = vld [vmem:[%s2] sm:$0x1]
    %v55 = vlaneseq
    %v56 = vshrl.u32 %v55, 7
    %v57 = vsub.s32 0, %v56
    %v58 = vrot.slane %v53, %v57
    %vm60 = vcmask 261120
    %v62 = vsel %vm60, %v47, 0
    %v65 = vsel %vm60, %v48, 0
    %67 = vmatprep.subr.mxu0 0.0
    %68 = vmatpush1.msra.mxu0 %v49
    %69 = vmatprep.subr.mxu0 0.0
    %70 = vmatpush1.msra.mxu0 %v50
    %71 = vmatprep.subr.mxu0 0.0
    %72 = vmatpush1.msra.mxu0 %v51
    %73 = vmatprep.subr.mxu0 0.0
    %74 = vmatpush1.msra.mxu0 %v52
    %75 = vmatprep.subr.mxu0 0.0
    %76 = vmatpush1.msra.mxu0 0.0
    %77 = vmatprep.subr.mxu0 0.0
    %78 = vmatpush1.msra.mxu0 0.0
    %79 = vmatprep.subr.mxu0 0.0
    %80 = vmatpush1.msra.mxu0 0.0
    %81 = vmatprep.subr.mxu0 0.0
    %82 = vmatpush1.msra.mxu0 0.0
    %83 = vmatprep.subr.mxu0 0.0
    %84 = vmatpush1.msra.mxu0 0.0
    %85 = vmatprep.subr.mxu0 0.0
    %86 = vmatpush1.msra.mxu0 0.0
    %87 = vmatprep.subr.mxu0 0.0
    %88 = vmatpush1.msra.mxu0 0.0
    %89 = vmatprep.subr.mxu0 0.0
    %90 = vmatpush1.msra.mxu0 0.0
    %91 = vmatprep.subr.mxu0 0.0
    %92 = vmatpush1.msra.mxu0 0.0
    %93 = vmatprep.subr.mxu0 0.0
    %94 = vmatpush1.msra.mxu0 0.0
    %95 = vmatprep.subr.mxu0 0.0
    %96 = vmatpush1.msra.mxu0 0.0
    %97 = vmatprep.subr.mxu0 0.0
    %98 = vmatpush1.msra.mxu0 0.0
    %99 = vmatprep.subr.mxu0 0.0
    %100 = vmatpush1.msra.mxu0 0.0
    %101 = vmatprep.subr.mxu0 0.0
    %102 = vmatpush1.msra.mxu0 0.0
    %103 = vmatprep.subr.mxu0 0.0
    %104 = vmatpush1.msra.mxu0 0.0
    %105 = vmatprep.subr.mxu0 0.0
    %106 = vmatpush1.msra.mxu0 0.0
    %107 = vmatprep.subr.mxu0 0.0
    %108 = vmatpush1.msra.mxu0 0.0
    %109 = vmatprep.subr.mxu0 0.0
    %110 = vmatpush1.msra.mxu0 0.0
    %111 = vmatprep.subr.mxu0 0.0
    %112 = vmatpush1.msra.mxu0 0.0
    %113 = vmatprep.subr.mxu0 0.0
    %114 = vmatpush1.msra.mxu0 0.0
    %115 = vmatprep.subr.mxu0 0.0
    %116 = vmatpush1.msra.mxu0 0.0
    %117 = vmatprep.subr.mxu0 0.0
    %118 = vmatpush1.msra.mxu0 0.0
    %119 = vmatprep.subr.mxu0 0.0
    %120 = vmatpush1.msra.mxu0 0.0
    %121 = vmatprep.subr.mxu0 0.0
    %122 = vmatpush1.msra.mxu0 0.0
    %123 = vmatprep.subr.mxu0 0.0
    %124 = vmatpush1.msra.mxu0 0.0
    %125 = vmatprep.subr.mxu0 0.0
    %126 = vmatpush1.msra.mxu0 0.0
    %127 = vmatprep.subr.mxu0 0.0
    %128 = vmatpush1.msra.mxu0 0.0
    %129 = vmatprep.subr.mxu0 0.0
    %130 = vmatpush1.msra.mxu0 0.0
    %131 = vmatprep.mubr.f32.mxu0 0.0
    %132 = vmatmul.mubr.f32.gmra.mrb[0].mxu0 %v62
    %v133 = vpop.f32.mrb[0].mxu0
    %v134 = vadd.f32 %v58, %v133
    %v135 = vpop.f32.mrb[0].mxu0
    %136 = vmatprep.mubr.f32.mxu0 0.0
    %137 = vmatmul.mubr.f32.gmra.mrb[0].mxu0 %v65
    %v138 = vpop.f32.mrb[0].mxu0
    %v139 = vadd.f32 %v58, %v138
    %v140 = vpop.f32.mrb[0].mxu0
    %141 = vdwg.mxu0
    %142 = vst.msk [vmem:[#allocation7] sm:$0xff] %vm60, %v134
    %143 = vst.msk [vmem:[#allocation7 + $0x8] sm:$0xff] %vm60, %v139
    %146 = vrot.lane.b32.xlu0 %v134, 96
    %v147 = vpop.permute.xlu0 %146
    %148 = vrot.lane.b32.xlu0 %v139, 96
    %v149 = vpop.permute.xlu0 %148
    %152 = vst.msk [vmem:[#allocation8] sm:$0xff] %vm60, %v147
    %153 = vst.msk [vmem:[#allocation8 + $0x8] sm:$0xff] %vm60, %v149
    %154 = vrot.lane.b32.xlu0 %v134, 64
    %v155 = vpop.permute.xlu0 %154
    %156 = vrot.lane.b32.xlu0 %v139, 64
    %v157 = vpop.permute.xlu0 %156
    %160 = vst.msk [vmem:[#allocation10] sm:$0xff] %vm60, %v155
    %161 = vst.msk [vmem:[#allocation10 + $0x8] sm:$0xff] %vm60, %v157
    // Predicated region
    $region22: #{tpu_custom_call.1} parent=1 // pred_check
      _
    $region23: #{tpu_custom_call.1} parent=1 // pred_check_branch
      %163 = sbr.rel (0) target = $region25
    $region24: #{tpu_custom_call.1} parent=1 // pred_region
      %s165 = ssub.s32 256, 256
      %166 = vsyncadd [#allocation4], %s165
      %s167 = sshll.u32 [#allocation7], 4
      %s168 = int_to_ptr.vmem [resolvable:$true] %s167
      %173 = dma.vmem_to_hbm [thread:$0]  %s168, 256, %s3, [#allocation4], 128, 128, 8
    $region25: #{tpu_custom_call.1} parent=1 // pred_fallthru
      _
    // Predicated region
    $region26: #{tpu_custom_call.1} parent=1 // pred_check
      _
    $region27: #{tpu_custom_call.1} parent=1 // pred_check_branch
      %175 = sbr.rel (0) target = $region29
    $region28: #{tpu_custom_call.1} parent=1 // pred_region
      %s177 = ssub.s32 256, 256
      %178 = vsyncadd [#allocation9], %s177
      %s179 = sshll.u32 [#allocation8], 4
      %s180 = int_to_ptr.vmem [resolvable:$true] %s179
      %185 = dma.vmem_to_hbm [thread:$0]  %s180, 256, %s4, [#allocation9], 128, 128, 8
    $region29: #{tpu_custom_call.1} parent=1 // pred_fallthru
      _
    // Predicated region
    $region30: #{tpu_custom_call.1} parent=1 // pred_check
      _
    $region31: #{tpu_custom_call.1} parent=1 // pred_check_branch
      %187 = sbr.rel (0) target = $region33
    $region32: #{tpu_custom_call.1} parent=1 // pred_region
      %s189 = ssub.s32 256, 256
      %190 = vsyncadd [#allocation9], %s189
      %s191 = sshll.u32 [#allocation10], 4
      %s192 = int_to_ptr.vmem [resolvable:$true] %s191
      %197 = dma.vmem_to_hbm [thread:$0]  %s192, 256, %s5, [#allocation9], 128, 128, 8
    $region33: #{tpu_custom_call.1} parent=1 // pred_fallthru
      _
    // Predicated region
    $region34: #{tpu_custom_call.1} parent=1 // pred_check
      _
    $region35: #{tpu_custom_call.1} parent=1 // pred_check_branch
      %199 = sbr.rel (0) target = $region37
    $region36: #{tpu_custom_call.1} parent=1 // pred_region
      %200 = dma.done [#allocation4], 256
    $region37: #{tpu_custom_call.1} parent=1 // pred_fallthru
      _
    // Predicated region
    $region38: #{tpu_custom_call.1} parent=1 // pred_check
      _
    $region39: #{tpu_custom_call.1} parent=1 // pred_check_branch
      %202 = sbr.rel (0) target = $region41
    $region40: #{tpu_custom_call.1} parent=1 // pred_region
      %203 = dma.done [#allocation9], 256
    $region41: #{tpu_custom_call.1} parent=1 // pred_fallthru
      _
    // Predicated region
    $region42: #{tpu_custom_call.1} parent=1 // pred_check
      _
    $region43: #{tpu_custom_call.1} parent=1 // pred_check_branch
      %205 = sbr.rel (0) target = $region45
    $region44: #{tpu_custom_call.1} parent=1 // pred_region
      %206 = dma.done [#allocation9], 256
    $region45: #{tpu_custom_call.1} parent=1 // pred_fallthru
      _
    %207 = vsyncpa [#allocation3], 1
    %208 = vsyncpa [#allocation6], 1
    %209 = vsyncpa [#allocation4], 1
    %210 = vsyncpa [#allocation9], 1

</llo_original>
